<compile_context>
chip_gen: v5e
topology: v5e:2x2
jax: 0.10.0
libtpu: 0.0.40
codegen_flags: <defaults>
</compile_context>

<pallas_src>
import functools

import jax
import jax.numpy as jnp
from jax.experimental import pallas as pl
from jax.experimental.pallas import tpu as pltpu

LANES = 128
TM_MAX = 8192  # rows per tile: 2 inputs x 2 buffers x (8192*128*4B) = 16 MiB f32


def _focal_loss_kernel(x_ref, t_ref, o_ref, *, valid_rows, tm, tiles_per_core):
    p = pl.program_id(0)          # core-parallel axis (multi-TC chips)
    i = pl.program_id(1)          # sequential reduction axis

    @pl.when(i == 0)
    def _():
        o_ref[...] = jnp.zeros_like(o_ref)

    x = x_ref[...].astype(jnp.float32)
    tgt = t_ref[...].astype(jnp.float32)

    # Numerically-stable BCE-with-logits (matches torch):
    #   max(x, 0) - x*t + log(1 + exp(-|x|))
    bce = jnp.maximum(x, 0.0) - x * tgt + jnp.log1p(jnp.exp(-jnp.abs(x)))
    pt = jnp.exp(-bce)
    om = 1.0 - pt
    f_loss = om * om * bce        # gamma = 2 as an explicit multiply (no pow)

    # Rows at/after `valid_rows` only exist in the (possibly partial) final
    # tile; every other tile takes the mask-free hot path below.
    rows_left = valid_rows - (p * tiles_per_core + i) * tm

    @pl.when(rows_left >= tm)     # hot path: full tile, no masking at all
    def _():
        o_ref[...] += jnp.sum(
            f_loss.reshape(tm // 8, 8, LANES), axis=0, keepdims=True)

    @pl.when(rows_left < tm)      # boundary tile only: 1 iota + 1 compare
    def _():
        row = jax.lax.broadcasted_iota(jnp.int32, (tm, LANES), 0)
        masked = jnp.where(row < rows_left, f_loss, 0.0)
        o_ref[...] += jnp.sum(
            masked.reshape(tm // 8, 8, LANES), axis=0, keepdims=True)


def _round_up(a, b):
    return ((a + b - 1) // b) * b


def _sublanes(dtype):
    # packed sublane multiple for the second-to-last block dim
    return {4: 8, 2: 16, 1: 32}.get(jnp.dtype(dtype).itemsize, 8)


def _is_multi_tensorcore():
    try:
        kind = jax.devices()[0].device_kind.lower()
    except Exception:
        return False
    return ("7" in kind) or ("v4" in kind) or ("v5p" in kind)


def focal_loss(inputs, targets, *, tm_max=TM_MAX):
    """Pallas focal loss (gamma=2). inputs/targets: same arbitrary shape/dtype."""
    assert inputs.shape == targets.shape
    n_total = 1
    for d in inputs.shape:
        n_total *= d

    m_rows = _round_up(n_total, LANES) // LANES      # rows of the (M,128) slab
    sub = max(_sublanes(inputs.dtype), _sublanes(targets.dtype))
    tm = min(_round_up(tm_max, sub), _round_up(m_rows, sub))
    m_arr = max(m_rows, tm)                          # rows materialized (>= 1 tile)
    total_tiles = -(-m_arr // tm)

    n_cores = 1
    if _is_multi_tensorcore() and total_tiles >= 2 and total_tiles % 2 == 0:
        n_cores = 2                                  # even split, no empty tiles
    tiles_per_core = total_tiles // n_cores

    # Native dtype straight through (kernel upcasts).  Only pad when the flat
    # size is not already a whole number of rows / one full tile; pad values are
    # a sentinel (x=40, t=1) whose focal term is exactly 0 in f32, so padded
    # elements need no in-kernel mask.  (Zero-padding would bias the mean:
    # BCE(0,0) = log 2.)
    x = inputs.reshape(-1)
    t = targets.reshape(-1)
    pad = m_arr * LANES - n_total
    if pad:
        x = jnp.pad(x, (0, pad), constant_values=40)
        t = jnp.pad(t, (0, pad), constant_values=1)
    x2 = x.reshape(m_arr, LANES)
    t2 = t.reshape(m_arr, LANES)

    kernel = functools.partial(
        _focal_loss_kernel, valid_rows=m_arr, tm=tm,
        tiles_per_core=tiles_per_core)

    row_block = lambda p, i: (p * tiles_per_core + i, 0)

    partials = pl.pallas_call(
        kernel,
        out_shape=jax.ShapeDtypeStruct((n_cores, 8, LANES), jnp.float32),
        grid_spec=pltpu.PrefetchScalarGridSpec(
            num_scalar_prefetch=0,
            grid=(n_cores, tiles_per_core),
            in_specs=[
                pl.BlockSpec((tm, LANES), row_block),
                pl.BlockSpec((tm, LANES), row_block),
            ],
            out_specs=pl.BlockSpec((1, 8, LANES), lambda p, i: (p, 0, 0)),
        ),
        compiler_params=pltpu.CompilerParams(
            dimension_semantics=("parallel", "arbitrary"),
            vmem_limit_bytes=48 * 1024 * 1024,   # TM=8192 f32 needs >16 MiB (v5e default)
        ),
    )(x2, t2)

    # TODO(synk): for multi-billion-element inputs consider pairwise partials to
    # bound f32 accumulation drift.
    return jnp.sum(partials) * jnp.float32(1.0 / n_total)


def focal_loss_ref(inputs, targets):
    x = inputs.astype(jnp.float32)
    t = targets.astype(jnp.float32)
    bce = jnp.maximum(x, 0.0) - x * t + jnp.log1p(jnp.exp(-jnp.abs(x)))
    pt = jnp.exp(-bce)
    return jnp.mean((1.0 - pt) ** 2 * bce)


if __name__ == "__main__":
    key = jax.random.PRNGKey(0)
    k1, k2, k3, k4 = jax.random.split(key, 4)

    # logits (batch=2, channels=4, spatial=16x16); targets in {0, 1}
    x = jax.random.normal(k1, (2, 4, 16, 16), dtype=jnp.float32) * 2.0
    tgt = (jax.random.uniform(k2, (2, 4, 16, 16)) > 0.5).astype(jnp.float32)
    out = jax.block_until_ready(focal_loss(x, tgt))
    ref = focal_loss_ref(x, tgt)
    assert jnp.allclose(out, ref, rtol=1e-5, atol=1e-6), (out, ref)

    # non-128-aligned size: exercises the sentinel-pad path (no in-kernel mask)
    x_odd = jax.random.normal(k3, (3, 5, 7), dtype=jnp.float32)
    t_odd = (jax.random.uniform(k4, (3, 5, 7)) > 0.5).astype(jnp.float32)
    out_odd = jax.block_until_ready(focal_loss(x_odd, t_odd))
    ref_odd = focal_loss_ref(x_odd, t_odd)
    assert jnp.allclose(out_odd, ref_odd, rtol=1e-5, atol=1e-6), (out_odd, ref_odd)

    # partial final tile: exercises the boundary-gated row mask + multi-step
    # accumulation (tm_max=8 -> 3 tiles over 20 rows, last tile 4 valid rows)
    x_pt = jax.random.normal(k1, (4, 5, 128), dtype=jnp.float32)
    t_pt = (jax.random.uniform(k2, (4, 5, 128)) > 0.5).astype(jnp.float32)
    out_pt = jax.block_until_ready(focal_loss(x_pt, t_pt, tm_max=8))
    ref_pt = focal_loss_ref(x_pt, t_pt)
    assert jnp.allclose(out_pt, ref_pt, rtol=1e-5, atol=1e-6), (out_pt, ref_pt)

    # bf16 fed natively (halved HBM bytes; tm rounded to 16 sublanes)
    x_bf = jax.random.normal(k3, (4, 8, 32), dtype=jnp.float32).astype(jnp.bfloat16)
    t_bf = (jax.random.uniform(k4, (4, 8, 32)) > 0.5).astype(jnp.bfloat16)
    out_bf = jax.block_until_ready(focal_loss(x_bf, t_bf))
    ref_bf = focal_loss_ref(x_bf, t_bf)
    assert jnp.allclose(out_bf, ref_bf, rtol=1e-4, atol=1e-5), (out_bf, ref_bf)

    print("KERNEL_OK")
</pallas_src>

<mosaic_0001>
module attributes {stable_mosaic.version = 11 : i64} {
  func.func @_focal_loss_kernel(%arg0: i32, %arg1: i32, %arg2: memref<16x128xf32, #tpu.memory_space<vmem>>, %arg3: memref<16x128xf32, #tpu.memory_space<vmem>>, %arg4: memref<1x8x128xf32, #tpu.memory_space<vmem>>) attributes {dimension_semantics = [#tpu.dimension_semantics<parallel>, #tpu.dimension_semantics<arbitrary>], iteration_bounds = array<i64: 1, 1>, scalar_prefetch = 0 : i64, scratch_operands = 0 : i64, tpu.core_type = #tpu.core_type<tc>, window_params = [{transform_indices = @transform_0, window_bounds = array<i64: 16, 128>}, {transform_indices = @transform_1, window_bounds = array<i64: 16, 128>}, {transform_indices = @transform_2, window_bounds = array<i64: 1, 8, 128>}]} {
    %c0_i32 = arith.constant 0 : i32
    %0 = arith.cmpi eq, %arg1, %c0_i32 : i32
    %1 = arith.extui %0 : i1 to i32
    %c0_i32_0 = arith.constant 0 : i32
    %2 = arith.cmpi ne, %1, %c0_i32_0 : i32
    scf.if %2 {
      %cst_12 = arith.constant 0.000000e+00 : f32
      %32 = vector.broadcast %cst_12 : f32 to vector<1x8x128xf32>
      %c0_13 = arith.constant 0 : index
      %c0_14 = arith.constant 0 : index
      %c0_15 = arith.constant 0 : index
      %33 = vector.load %arg4[%c0_13, %c0_14, %c0_15] : memref<1x8x128xf32, #tpu.memory_space<vmem>>, vector<1x8x128xf32>
      tpu.vector_store %arg4[%c0_13, %c0_14, %c0_15], %32 {strides = array<i32>} : memref<1x8x128xf32, #tpu.memory_space<vmem>>, vector<1x8x128xf32>,
    } else {
    }
    %c0 = arith.constant 0 : index
    %c0_1 = arith.constant 0 : index
    %3 = vector.load %arg2[%c0, %c0_1] : memref<16x128xf32, #tpu.memory_space<vmem>>, vector<16x128xf32>
    %c0_2 = arith.constant 0 : index
    %c0_3 = arith.constant 0 : index
    %4 = vector.load %arg3[%c0_2, %c0_3] : memref<16x128xf32, #tpu.memory_space<vmem>>, vector<16x128xf32>
    %cst = arith.constant 0.000000e+00 : f32
    %5 = vector.broadcast %cst : f32 to vector<16x128xf32>
    %6 = arith.maximumf %3, %5 : vector<16x128xf32>
    %7 = arith.mulf %3, %4 : vector<16x128xf32>
    %8 = arith.subf %6, %7 : vector<16x128xf32>
    %9 = math.absf %3 : vector<16x128xf32>
    %cst_4 = arith.constant 0.000000e+00 : f32
    %10 = vector.broadcast %cst_4 : f32 to vector<16x128xf32>
    %11 = arith.subf %10, %9 : vector<16x128xf32>
    %12 = math.exp %11 : vector<16x128xf32>
    %13 = math.log1p %12 : vector<16x128xf32>
    %14 = arith.addf %8, %13 : vector<16x128xf32>
    %cst_5 = arith.constant 0.000000e+00 : f32
    %15 = vector.broadcast %cst_5 : f32 to vector<16x128xf32>
    %16 = arith.subf %15, %14 : vector<16x128xf32>
    %17 = math.exp %16 : vector<16x128xf32>
    %cst_6 = arith.constant 1.000000e+00 : f32
    %18 = vector.broadcast %cst_6 : f32 to vector<16x128xf32>
    %19 = arith.subf %18, %17 : vector<16x128xf32>
    %20 = arith.mulf %19, %19 : vector<16x128xf32>
    %21 = arith.mulf %20, %14 : vector<16x128xf32>
    %c1_i32 = arith.constant 1 : i32
    %22 = arith.muli %arg0, %c1_i32 : i32
    %23 = arith.addi %22, %arg1 : i32
    %c16_i32 = arith.constant 16 : i32
    %24 = arith.muli %23, %c16_i32 : i32
    %c16_i32_7 = arith.constant 16 : i32
    %25 = arith.subi %c16_i32_7, %24 : i32
    %c16_i32_8 = arith.constant 16 : i32
    %26 = arith.cmpi sge, %25, %c16_i32_8 : i32
    %27 = arith.extui %26 : i1 to i32
    %c0_i32_9 = arith.constant 0 : i32
    %28 = arith.cmpi ne, %27, %c0_i32_9 : i32
    scf.if %28 {
      %c0_12 = arith.constant 0 : index
      %c0_13 = arith.constant 0 : index
      %c0_14 = arith.constant 0 : index
      %32 = vector.load %arg4[%c0_12, %c0_13, %c0_14] : memref<1x8x128xf32, #tpu.memory_space<vmem>>, vector<1x8x128xf32>
      %33 = vector.shape_cast %21 : vector<16x128xf32> to vector<2x8x128xf32>
      %cst_15 = arith.constant dense<0.000000e+00> : vector<8x128xf32>
      %34 = vector.multi_reduction <add>, %33, %cst_15 [0] : vector<2x8x128xf32> to vector<8x128xf32>
      %35 = vector.shape_cast %34 : vector<8x128xf32> to vector<1x8x128xf32>
      %36 = arith.addf %32, %35 : vector<1x8x128xf32>
      %c0_16 = arith.constant 0 : index
      %c0_17 = arith.constant 0 : index
      %c0_18 = arith.constant 0 : index
      %37 = vector.load %arg4[%c0_16, %c0_17, %c0_18] : memref<1x8x128xf32, #tpu.memory_space<vmem>>, vector<1x8x128xf32>
      tpu.vector_store %arg4[%c0_16, %c0_17, %c0_18], %36 {strides = array<i32>} : memref<1x8x128xf32, #tpu.memory_space<vmem>>, vector<1x8x128xf32>,
    } else {
    }
    %c16_i32_10 = arith.constant 16 : i32
    %29 = arith.cmpi slt, %25, %c16_i32_10 : i32
    %30 = arith.extui %29 : i1 to i32
    %c0_i32_11 = arith.constant 0 : i32
    %31 = arith.cmpi ne, %30, %c0_i32_11 : i32
    scf.if %31 {
      %32 = tpu.iota {dimensions = array<i32: 0>} : vector<16x128xi32>
      %33 = vector.broadcast %25 : i32 to vector<16x128xi32>
      %34 = arith.cmpi slt, %32, %33 : vector<16x128xi32>
      %cst_12 = arith.constant 0.000000e+00 : f32
      %35 = vector.broadcast %cst_12 : f32 to vector<16x128xf32>
      %36 = arith.select %34, %21, %35 : vector<16x128xi1>, vector<16x128xf32>
      %c0_13 = arith.constant 0 : index
      %c0_14 = arith.constant 0 : index
      %c0_15 = arith.constant 0 : index
      %37 = vector.load %arg4[%c0_13, %c0_14, %c0_15] : memref<1x8x128xf32, #tpu.memory_space<vmem>>, vector<1x8x128xf32>
      %38 = vector.shape_cast %36 : vector<16x128xf32> to vector<2x8x128xf32>
      %cst_16 = arith.constant dense<0.000000e+00> : vector<8x128xf32>
      %39 = vector.multi_reduction <add>, %38, %cst_16 [0] : vector<2x8x128xf32> to vector<8x128xf32>
      %40 = vector.shape_cast %39 : vector<8x128xf32> to vector<1x8x128xf32>
      %41 = arith.addf %37, %40 : vector<1x8x128xf32>
      %c0_17 = arith.constant 0 : index
      %c0_18 = arith.constant 0 : index
      %c0_19 = arith.constant 0 : index
      %42 = vector.load %arg4[%c0_17, %c0_18, %c0_19] : memref<1x8x128xf32, #tpu.memory_space<vmem>>, vector<1x8x128xf32>
      tpu.vector_store %arg4[%c0_17, %c0_18, %c0_19], %41 {strides = array<i32>} : memref<1x8x128xf32, #tpu.memory_space<vmem>>, vector<1x8x128xf32>,
    } else {
    }
    return
  }
  func.func @transform_0(%arg0: i32, %arg1: i32) -> (i32, i32) {
    %c1_i32 = arith.constant 1 : i32
    %0 = arith.muli %arg0, %c1_i32 : i32
    %1 = arith.addi %0, %arg1 : i32
    %c0_i32 = arith.constant 0 : i32
    %c0_i32_0 = arith.constant 0 : i32
    return %1, %c0_i32 : i32, i32
  }
  func.func @transform_1(%arg0: i32, %arg1: i32) -> (i32, i32) {
    %c1_i32 = arith.constant 1 : i32
    %0 = arith.muli %arg0, %c1_i32 : i32
    %1 = arith.addi %0, %arg1 : i32
    %c0_i32 = arith.constant 0 : i32
    %c0_i32_0 = arith.constant 0 : i32
    return %1, %c0_i32 : i32, i32
  }
  func.func @transform_2(%arg0: i32, %arg1: i32) -> (i32, i32, i32) {
    %c0_i32 = arith.constant 0 : i32
    %c0_i32_0 = arith.constant 0 : i32
    %c0_i32_1 = arith.constant 0 : i32
    return %arg0, %c0_i32, %c0_i32_0 : i32, i32, i32
  }
}

</mosaic_0001>

<llo_original>
// kernel: tpu_custom_call.1
$region0: #{tpu_custom_call.1}
  #allocation0 [shape = 'u32[]', space=smem, size = 0x4, offset = 0x4, fixed_abs, tag = 'smem constant byte address 0x4 - core index']
  #allocation1 [shape = 'u32[72,128]{1,0:T(1,128)}', space=vmem, size = 0x9000, scoped, tag = 'internal scratch']
  %s0 = inlined_call_operand.hbm [shape: f32[16,128], index: 0, kind: input, shape index: {}]
  %s1 = inlined_call_operand.hbm [shape: f32[16,128], index: 1, kind: input, shape index: {}]
  %s2 = inlined_call_operand.hbm [shape: f32[1,8,128], index: 2, kind: output, shape index: {}]
  %s3 = sld [smem:[#allocation0]]
  $region38: #{tpu_custom_call.1} parent=0
    _
  %s5 = ssub.s32 1, %s3
  %s6 = scalar_select 0, %s5, %s3
  $region1: #{tpu_custom_call.1} parent=0
    #allocation2 [shape = 'u8[8192]{0}', space=vmem, size = 0x2000, scoped, tag = 'input window, operand 0, single buffered']
    #allocation3 [shape = 's32[1]{0}', space=sflag, size = 0x4, scoped, tag = 'scoped memory for tpu_custom_call.1']
    #allocation4 [shape = 's32[1]{0}', space=sflag, size = 0x4, scoped, tag = 'scoped memory for tpu_custom_call.1']
    #allocation5 [shape = 'u8[8192]{0}', space=vmem, size = 0x2000, scoped, tag = 'input window, operand 1, single buffered']
    #allocation6 [shape = 's32[1]{0}', space=sflag, size = 0x4, scoped, tag = 'scoped memory for tpu_custom_call.1']
    #allocation7 [shape = 'u8[4096]{0}', space=vmem, size = 0x1000, scoped, tag = 'output window, operand 0, single buffered']
    %7 = vsyncpa [#allocation3], 0
    %8 = vsyncpa [#allocation6], 0
    %9 = vsyncpa [#allocation4], 0
    // Predicated region
    $region2: #{tpu_custom_call.1} parent=1 // pred_check
      _
    $region3: #{tpu_custom_call.1} parent=1 // pred_check_branch
      %11 = sbr.rel (0) target = $region5
    $region4: #{tpu_custom_call.1} parent=1 // pred_region
      %s12 = sadd.s32 0, 0
      %s13 = smul.u32 2, %s12
      %15 = vsyncadd [#allocation3], 0
      %s16 = smul.addr %s13, 8
      %s17 = scalar_lea.hbm %s0, %s16
      %s18 = sshll.u32 %s17, 4
      %s19 = int_to_ptr.hbm [resolvable:$true] %s18
      %s20 = sshll.u32 [#allocation2], 4
      %s21 = int_to_ptr.vmem [resolvable:$true] %s20
      %26 = dma.hbm_to_vmem [thread:$0]  %s19, 256, %s21, [#allocation3], 128, 128, 8
    $region5: #{tpu_custom_call.1} parent=1 // pred_fallthru
      _
    // Predicated region
    $region6: #{tpu_custom_call.1} parent=1 // pred_check
      _
    $region7: #{tpu_custom_call.1} parent=1 // pred_check_branch
      %28 = sbr.rel (0) target = $region9
    $region8: #{tpu_custom_call.1} parent=1 // pred_region
      %s29 = sadd.s32 0, 0
      %s30 = smul.u32 2, %s29
      %32 = vsyncadd [#allocation6], 0
      %s33 = smul.addr %s30, 8
      %s34 = scalar_lea.hbm %s1, %s33
      %s35 = sshll.u32 %s34, 4
      %s36 = int_to_ptr.hbm [resolvable:$true] %s35
      %s37 = sshll.u32 [#allocation5], 4
      %s38 = int_to_ptr.vmem [resolvable:$true] %s37
      %43 = dma.hbm_to_vmem [thread:$0]  %s36, 256, %s38, [#allocation6], 128, 128, 8
    $region9: #{tpu_custom_call.1} parent=1 // pred_fallthru
      _
    // Predicated region
    $region10: #{tpu_custom_call.1} parent=1 // pred_check
      _
    $region11: #{tpu_custom_call.1} parent=1 // pred_check_branch
      %45 = sbr.rel (0) target = $region13
    $region12: #{tpu_custom_call.1} parent=1 // pred_region
      %47 = dma.done [#allocation3], 256
    $region13: #{tpu_custom_call.1} parent=1 // pred_fallthru
      _
    // Predicated region
    $region14: #{tpu_custom_call.1} parent=1 // pred_check
      _
    $region15: #{tpu_custom_call.1} parent=1 // pred_check_branch
      %49 = sbr.rel (0) target = $region17
    $region16: #{tpu_custom_call.1} parent=1 // pred_region
      %51 = dma.done [#allocation6], 256
    $region17: #{tpu_custom_call.1} parent=1 // pred_fallthru
      _
    %s52 = sadd.s32 0, 0
    %s53 = smul.u32 2, %s52
    %s54 = sadd.s32 0, 0
    %s55 = smul.u32 2, %s54
    %p56 = scmp.eq.s32.totalorder 0, 0
    // Predicated region
    $region18: #{tpu_custom_call.1} parent=1 // pred_check
      %p57 = pneg %p56
    $region19: #{tpu_custom_call.1} parent=1 // pred_check_branch
      %59 = sbr.rel (%p57) target = $region21
    $region20: #{tpu_custom_call.1} parent=1 // pred_region
      %60 = vst [vmem:[#allocation7] sm:$0xff] 0.0
    $region21: #{tpu_custom_call.1} parent=1 // pred_fallthru
      _
    %v61 = vld [vmem:[#allocation2] sm:$0xff]
    %v62 = vld [vmem:[#allocation2 + $0x8] sm:$0xff]
    %v63 = vld [vmem:[#allocation5] sm:$0xff]
    %v64 = vld [vmem:[#allocation5 + $0x8] sm:$0xff]
    %v65 = vmax.f32 %v61, 0.0
    %v66 = vmax.f32 %v62, 0.0
    %v67 = vmul.f32 %v61, %v63
    %v68 = vmul.f32 %v62, %v64
    %v69 = vsub.f32 %v65, %v67
    %v70 = vsub.f32 %v66, %v68
    %v71 = vand.u32 2147483647, %v61
    %v72 = vand.u32 2147483647, %v62
    %v73 = vsub.f32 0.0, %v71
    %v74 = vsub.f32 0.0, %v72
    %v75 = vmul.f32 %v73, 1.442695
    %v76 = vpow.pop %v75
    %v77 = vmul.f32 %v74, 1.442695
    %v78 = vpow.pop %v77
    %v79 = vadd.f32 %v76, 1.0
    %v80 = vlog2.pop %v79
    %v81 = vmul.f32 %v80, 0.6931472
    %v82 = vmul.f32 -0.5, %v76
    %v83 = vadd.f32 %v82, 1.0
    %v84 = vmul.f32 %v83, %v76
    %v85 = vand.u32 2147483647, %v76
    %vm86 = vcmp.lt.f32.partialorder %v85, 0.0004427343
    %v87 = vsel %vm86, %v84, %v81
    %v88 = vadd.f32 %v78, 1.0
    %v89 = vlog2.pop %v88
    %v90 = vmul.f32 %v89, 0.6931472
    %v91 = vmul.f32 -0.5, %v78
    %v92 = vadd.f32 %v91, 1.0
    %v93 = vmul.f32 %v92, %v78
    %v94 = vand.u32 2147483647, %v78
    %vm95 = vcmp.lt.f32.partialorder %v94, 0.0004427343
    %v96 = vsel %vm95, %v93, %v90
    %v97 = vadd.f32 %v69, %v87
    %v98 = vadd.f32 %v70, %v96
    %v99 = vsub.f32 0.0, %v97
    %v100 = vsub.f32 0.0, %v98
    %v101 = vmul.f32 %v99, 1.442695
    %v102 = vpow.pop %v101
    %v103 = vmul.f32 %v100, 1.442695
    %v104 = vpow.pop %v103
    %v105 = vsub.f32 1.0, %v102
    %v106 = vsub.f32 1.0, %v104
    %v107 = vmul.f32 %v105, %v105
    %v108 = vmul.f32 %v106, %v106
    %v109 = vmul.f32 %v107, %v97
    %v110 = vmul.f32 %v108, %v98
    %s111 = sadd.s32 0, 0
    %s112 = smul.u32 %s111, 16
    %s113 = ssub.s32 16, %s112
    %p114 = scmp.ge.s32.totalorder %s113, 16
    // Predicated region
    $region22: #{tpu_custom_call.1} parent=1 // pred_check
      %p115 = pneg %p114
    $region23: #{tpu_custom_call.1} parent=1 // pred_check_branch
      %117 = sbr.rel (%p115) target = $region25
    $region24: #{tpu_custom_call.1} parent=1 // pred_region
      %v118 = vld [vmem:[#allocation7] sm:$0xff]
      %v119 = vadd.f32 %v109, %v110
      %v120 = vadd.f32 %v118, %v119
      %121 = vst [vmem:[#allocation7] sm:$0xff] %v120
    $region25: #{tpu_custom_call.1} parent=1 // pred_fallthru
      _
    %p122 = scmp.lt.s32.totalorder %s113, 16
    // Predicated region
    $region26: #{tpu_custom_call.1} parent=1 // pred_check
      %p123 = pneg %p122
    $region27: #{tpu_custom_call.1} parent=1 // pred_check_branch
      %125 = sbr.rel (%p123) target = $region29
    $region28: #{tpu_custom_call.1} parent=1 // pred_region
      %v126 = vlaneseq
      %v127 = vshrl.u32 %v126, 7
      %v128 = vadd.s32 %v127, 8
      %v129 = vstv %s113
      %vm130 = vcmp.lt.s32.totalorder %v127, %v129
      %vm131 = vcmp.lt.s32.totalorder %v128, %v129
      %v132 = vsel %vm130, %v109, 0.0
      %v133 = vsel %vm131, %v110, 0.0
      %v134 = vld [vmem:[#allocation7] sm:$0xff]
      %v135 = vadd.f32 %v132, %v133
      %v136 = vadd.f32 %v134, %v135
      %137 = vst [vmem:[#allocation7] sm:$0xff] %v136
    $region29: #{tpu_custom_call.1} parent=1 // pred_fallthru
      _
    // Predicated region
    $region30: #{tpu_custom_call.1} parent=1 // pred_check
      _
    $region31: #{tpu_custom_call.1} parent=1 // pred_check_branch
      %139 = sbr.rel (0) target = $region33
    $region32: #{tpu_custom_call.1} parent=1 // pred_region
      %141 = vsyncadd [#allocation4], 0
      %s143 = sshll.u32 [#allocation7], 4
      %s144 = int_to_ptr.vmem [resolvable:$true] %s143
      %s145 = sshll.u32 %s2, 4
      %s146 = int_to_ptr.hbm [resolvable:$true] %s145
      %148 = dma.vmem_to_hbm [thread:$0]  %s144, 128, %s146, [#allocation4]
    $region33: #{tpu_custom_call.1} parent=1 // pred_fallthru
      _
    // Predicated region
    $region34: #{tpu_custom_call.1} parent=1 // pred_check
      _
    $region35: #{tpu_custom_call.1} parent=1 // pred_check_branch
      %150 = sbr.rel (0) target = $region37
    $region36: #{tpu_custom_call.1} parent=1 // pred_region
      %152 = dma.done [#allocation4], 128
    $region37: #{tpu_custom_call.1} parent=1 // pred_fallthru
      _
    %153 = vsyncpa [#allocation3], 1
    %154 = vsyncpa [#allocation6], 1
    %155 = vsyncpa [#allocation4], 1

</llo_original>
